<compile_context>
chip_gen: v7x
topology: tpu7x:2x2x1
jax: 0.10.0
libtpu: 0.0.40
codegen_flags: <defaults>
</compile_context>

<pallas_src>
import functools

import numpy as np

import jax
import jax.numpy as jnp
from jax import lax
from jax.experimental import pallas as pl
from jax.experimental.pallas import tpu as pltpu


def _round_up(x, m):
    return ((x + m - 1) // m) * m


# ---------------------------------------------------------------------------
# Kernel 1: fused per-atom polynomial features (all systems in one call).
# ---------------------------------------------------------------------------
def _features_kernel(d_ref, idx_ref, o_ref, *, inv_cutoff, max_k, tile_atoms):
    # d_ref:   (3, TP)      f32  displacement components, pairs on lanes
    # idx_ref: (TP, 1)      i32  global first_atom id per pair (-1 = padding)
    # o_ref:   (max_k, TA)  f32  features^T accumulator, atoms on lanes
    ai = pl.program_id(0)   # atom tile  (parallel)
    pi = pl.program_id(1)   # pair tile  (arbitrary / reduction)

    @pl.when(pi == 0)
    def _():
        o_ref[...] = jnp.zeros_like(o_ref)

    d = d_ref[...]
    # r^2 via three lane-dense VPU multiplies (no XLU cross-lane reduce);
    # fold 1/cutoff into a multiply; sqrt uses the otherwise-idle EUP slot.
    r2 = d[0:1, :] * d[0:1, :] + d[1:2, :] * d[1:2, :] + d[2:3, :] * d[2:3, :]
    r = jnp.sqrt(r2) * inv_cutoff                                  # (1, TP)

    # r^0 .. r^(max_k-1) by cumulative products (exact, no pow(0,0) issue),
    # stacked along sublanes -> (max_k, TP), lane-dense.
    cols = [jnp.ones_like(r)]
    for _ in range(1, max_k):
        cols.append(cols[-1] * r)
    powers_t = jnp.concatenate(cols, axis=0)

    # One-hot (TP, TA): onehot[p, a] = (idx[p] == global atom id of column a).
    # Padded pairs have idx == -1 and contribute nothing.
    tp = d.shape[1]
    atom_iota = lax.broadcasted_iota(jnp.int32, (tp, tile_atoms), 1) + ai * tile_atoms
    onehot = (idx_ref[...] == atom_iota).astype(jnp.bfloat16)

    # Scatter-add as a native [M,K]x[K,N] MXU matmul (no operand transposes):
    #   features^T[k, a] += sum_p powers_t[k, p] * onehot[p, a]
    # bf16 operands (one-hot exact; powers rounded once), f32 accumulation.
    o_ref[...] += lax.dot_general(
        powers_t.astype(jnp.bfloat16),
        onehot,
        dimension_numbers=(((1,), (0,)), ((), ())),
        preferred_element_type=jnp.float32,
    )


def fused_scatter_features(d_t, idx, n_atoms_pad, *, cutoff, max_k,
                           tile_pairs, tile_atoms):
    p_pad = d_t.shape[1]
    kernel = functools.partial(
        _features_kernel,
        inv_cutoff=1.0 / float(cutoff),
        max_k=int(max_k),
        tile_atoms=int(tile_atoms),
    )
    return pl.pallas_call(
        kernel,
        out_shape=jax.ShapeDtypeStruct((max_k, n_atoms_pad), jnp.float32),
        grid=(n_atoms_pad // tile_atoms, p_pad // tile_pairs),
        in_specs=[
            pl.BlockSpec((3, tile_pairs), lambda ai, pi: (0, pi)),
            pl.BlockSpec((tile_pairs, 1), lambda ai, pi: (pi, 0)),
        ],
        out_specs=pl.BlockSpec((max_k, tile_atoms), lambda ai, pi: (0, ai)),
        compiler_params=pltpu.CompilerParams(
            dimension_semantics=("parallel", "arbitrary"),
        ),
    )(d_t, idx)


# ---------------------------------------------------------------------------
# Kernel 2: tiled, lane-dense PCA projection  (Vh[:3] @ features^T).
# ---------------------------------------------------------------------------
def _pca_project_kernel(vt_ref, f_ref, o_ref):
    # vt_ref: (3, max_k), f_ref: (max_k, TN) -> o_ref: (3, TN)
    o_ref[...] = lax.dot_general(
        vt_ref[...],
        f_ref[...],
        dimension_numbers=(((1,), (0,)), ((), ())),
        preferred_element_type=jnp.float32,
    )


def pca_project_t(features_t, vt3, *, tile_n):
    max_k, n_pad = features_t.shape
    return pl.pallas_call(
        _pca_project_kernel,
        out_shape=jax.ShapeDtypeStruct((3, n_pad), jnp.float32),
        grid=(n_pad // tile_n,),
        in_specs=[
            pl.BlockSpec((3, max_k), lambda i: (0, 0)),
            pl.BlockSpec((max_k, tile_n), lambda i: (0, i)),
        ],
        out_specs=pl.BlockSpec((3, tile_n), lambda i: (0, i)),
        compiler_params=pltpu.CompilerParams(
            dimension_semantics=("parallel",),
        ),
    )(vt3, features_t)


# ---------------------------------------------------------------------------
# Forward pass.
# ---------------------------------------------------------------------------
def feature_model_forward(systems, *, cutoff, max_k, tile_pairs=512, tile_atoms=256):
    """FeatureModel.forward.

    `systems` is a list of dicts with:
      'n_atoms'       : int
      'displacements' : (n_pairs, 3) f32   (== neighbors.values.reshape(-1, 3))
      'first_atom'    : (n_pairs,)   int32 (== neighbors.samples.column('first_atom'))

    Returns (features_pca, samples) mirroring the TensorBlock values / samples.
    """
    n_atoms_list = [int(s["n_atoms"]) for s in systems]
    n_pairs_list = [int(s["displacements"].shape[0]) for s in systems]
    n_total = sum(n_atoms_list)
    p_total = sum(n_pairs_list)

    # ---- host-side glue (static shapes): global atom ids + samples tensor ----
    atom_offsets = np.cumsum([0] + n_atoms_list[:-1]).astype(np.int32)
    pair_offset_vec = np.repeat(atom_offsets, n_pairs_list).astype(np.int32)
    samples_tensor = jnp.asarray(
        np.stack(
            [
                np.repeat(np.arange(len(systems), dtype=np.int32), n_atoms_list),
                np.concatenate([np.arange(n, dtype=np.int32) for n in n_atoms_list]),
            ],
            axis=1,
        )
    )

    a_pad = _round_up(max(n_total, 1), tile_atoms)
    p_pad = _round_up(max(p_total, 1), tile_pairs)

    # Single fused neighbor list, lane-dense: pairs on lanes.
    d_all = jnp.concatenate(
        [s["displacements"].astype(jnp.float32) for s in systems], axis=0
    )                                                           # (P, 3)
    d_t = jnp.pad(d_all.T, ((0, 0), (0, p_pad - p_total)))      # (3, P_pad)

    idx_all = jnp.concatenate(
        [s["first_atom"].astype(jnp.int32) for s in systems], axis=0
    ) + jnp.asarray(pair_offset_vec)                            # (P,) global ids
    idx = jnp.pad(idx_all, (0, p_pad - p_total), constant_values=-1)
    idx = idx.reshape(p_pad, 1)

    # ---- Pallas kernel 1: fused per-atom polynomial features ----
    features_t_pad = fused_scatter_features(
        d_t, idx, a_pad, cutoff=cutoff, max_k=max_k,
        tile_pairs=tile_pairs, tile_atoms=tile_atoms,
    )                                                           # (max_k, A_pad)

    features_tensor = features_t_pad[:, :n_total].T             # (N, max_k)

    # TODO(synk): SVD has no Pallas TPU equivalent; done with jnp.linalg.svd.
    # Matches torch reference exactly: SVD of (features - scalar global mean),
    # then projection of the UN-centered features onto Vh[:3].
    centered = features_tensor - features_tensor.mean()
    _, _, vh = jnp.linalg.svd(centered, full_matrices=False)
    vt3 = vh[:3].astype(jnp.float32)                            # (3, max_k)

    # ---- Pallas kernel 2: tiled lane-dense PCA projection ----
    proj_t_pad = pca_project_t(features_t_pad, vt3, tile_n=tile_atoms)  # (3, A_pad)
    features_pca = proj_t_pad[:, :n_total].T                    # (N, 3)

    return features_pca, samples_tensor


if __name__ == "__main__":
    key = jax.random.PRNGKey(0)
    cutoff = 3.0
    max_k = 8
    n_atoms = 8
    n_pairs = 32
    n_systems = 2

    systems = []
    for s in range(n_systems):
        key, k_d, k_i = jax.random.split(key, 3)
        displacements = jax.random.normal(k_d, (n_pairs, 3), dtype=jnp.float32) * (
            cutoff / 2.0
        )
        first_atom = jax.random.randint(k_i, (n_pairs,), 0, n_atoms, dtype=jnp.int32)
        systems.append(
            {
                "n_atoms": n_atoms,
                "displacements": displacements,
                "first_atom": first_atom,
            }
        )

    features_pca, samples = feature_model_forward(systems, cutoff=cutoff, max_k=max_k)
    jax.block_until_ready((features_pca, samples))

    assert features_pca.shape == (n_systems * n_atoms, 3)
    assert samples.shape == (n_systems * n_atoms, 2)
    assert bool(jnp.all(jnp.isfinite(features_pca)))
    print("KERNEL_OK")
</pallas_src>

<mosaic_0001>
module attributes {stable_mosaic.version = 11 : i64} {
  func.func @_features_kernel(%arg0: i32, %arg1: i32, %arg2: memref<3x512xf32, #tpu.memory_space<vmem>>, %arg3: memref<512x1xi32, #tpu.memory_space<vmem>>, %arg4: memref<8x256xf32, #tpu.memory_space<vmem>>) attributes {dimension_semantics = [#tpu.dimension_semantics<parallel>, #tpu.dimension_semantics<arbitrary>], iteration_bounds = array<i64: 1, 1>, scalar_prefetch = 0 : i64, scratch_operands = 0 : i64, tpu.core_type = #tpu.core_type<tc>, window_params = [{transform_indices = @transform_0, window_bounds = array<i64: 3, 512>}, {transform_indices = @transform_1, window_bounds = array<i64: 512, 1>}, {transform_indices = @transform_2, window_bounds = array<i64: 8, 256>}]} {
    %c0_i32 = arith.constant 0 : i32
    %0 = arith.cmpi eq, %arg1, %c0_i32 : i32
    %1 = arith.extui %0 : i1 to i32
    %c0_i32_0 = arith.constant 0 : i32
    %2 = arith.cmpi ne, %1, %c0_i32_0 : i32
    scf.if %2 {
      %cst_10 = arith.constant 0.000000e+00 : f32
      %42 = vector.broadcast %cst_10 : f32 to vector<8x256xf32>
      %c0_11 = arith.constant 0 : index
      %c0_12 = arith.constant 0 : index
      %43 = vector.load %arg4[%c0_11, %c0_12] : memref<8x256xf32, #tpu.memory_space<vmem>>, vector<8x256xf32>
      tpu.vector_store %arg4[%c0_11, %c0_12], %42 {strides = array<i32>} : memref<8x256xf32, #tpu.memory_space<vmem>>, vector<8x256xf32>,
    } else {
    }
    %c0 = arith.constant 0 : index
    %c0_1 = arith.constant 0 : index
    %3 = vector.load %arg2[%c0, %c0_1] : memref<3x512xf32, #tpu.memory_space<vmem>>, vector<3x512xf32>
    %4 = vector.extract_strided_slice %3 {offsets = [0, 0], sizes = [1, 512], strides = [1, 1]} : vector<3x512xf32> to vector<1x512xf32>
    %5 = vector.extract_strided_slice %3 {offsets = [0, 0], sizes = [1, 512], strides = [1, 1]} : vector<3x512xf32> to vector<1x512xf32>
    %6 = arith.mulf %4, %5 : vector<1x512xf32>
    %7 = vector.extract_strided_slice %3 {offsets = [1, 0], sizes = [1, 512], strides = [1, 1]} : vector<3x512xf32> to vector<1x512xf32>
    %8 = vector.extract_strided_slice %3 {offsets = [1, 0], sizes = [1, 512], strides = [1, 1]} : vector<3x512xf32> to vector<1x512xf32>
    %9 = arith.mulf %7, %8 : vector<1x512xf32>
    %10 = arith.addf %6, %9 : vector<1x512xf32>
    %11 = vector.extract_strided_slice %3 {offsets = [2, 0], sizes = [1, 512], strides = [1, 1]} : vector<3x512xf32> to vector<1x512xf32>
    %12 = vector.extract_strided_slice %3 {offsets = [2, 0], sizes = [1, 512], strides = [1, 1]} : vector<3x512xf32> to vector<1x512xf32>
    %13 = arith.mulf %11, %12 : vector<1x512xf32>
    %14 = arith.addf %10, %13 : vector<1x512xf32>
    %15 = math.sqrt %14 : vector<1x512xf32>
    %cst = arith.constant 0.333333343 : f32
    %16 = vector.broadcast %cst : f32 to vector<1x512xf32>
    %17 = arith.mulf %15, %16 : vector<1x512xf32>
    %cst_2 = arith.constant 1.000000e+00 : f32
    %18 = vector.broadcast %cst_2 : f32 to vector<1x512xf32>
    %19 = arith.mulf %18, %17 : vector<1x512xf32>
    %20 = arith.mulf %19, %17 : vector<1x512xf32>
    %21 = arith.mulf %20, %17 : vector<1x512xf32>
    %22 = arith.mulf %21, %17 : vector<1x512xf32>
    %23 = arith.mulf %22, %17 : vector<1x512xf32>
    %24 = arith.mulf %23, %17 : vector<1x512xf32>
    %25 = arith.mulf %24, %17 : vector<1x512xf32>
    %26 = tpu.concatenate %18, %19, %20, %21, %22, %23, %24, %25 in 0 : vector<1x512xf32>, vector<1x512xf32>, vector<1x512xf32>, vector<1x512xf32>, vector<1x512xf32>, vector<1x512xf32>, vector<1x512xf32>, vector<1x512xf32> -> vector<8x512xf32>
    %27 = tpu.iota {dimensions = array<i32: 1>} : vector<512x256xi32>
    %c256_i32 = arith.constant 256 : i32
    %28 = arith.muli %arg0, %c256_i32 : i32
    %29 = vector.broadcast %28 : i32 to vector<512x256xi32>
    %30 = arith.addi %27, %29 : vector<512x256xi32>
    %c0_3 = arith.constant 0 : index
    %c0_4 = arith.constant 0 : index
    %31 = vector.load %arg3[%c0_3, %c0_4] : memref<512x1xi32, #tpu.memory_space<vmem>>, vector<512x1xi32>
    %32 = vector.broadcast %31 : vector<512x1xi32> to vector<512x256xi32>
    %33 = arith.cmpi eq, %32, %30 : vector<512x256xi32>
    %34 = arith.extui %33 : vector<512x256xi1> to vector<512x256xi32>
    %35 = arith.sitofp %34 : vector<512x256xi32> to vector<512x256xf32>
    %36 = arith.truncf %35 : vector<512x256xf32> to vector<512x256xbf16>
    %c0_5 = arith.constant 0 : index
    %c0_6 = arith.constant 0 : index
    %37 = vector.load %arg4[%c0_5, %c0_6] : memref<8x256xf32, #tpu.memory_space<vmem>>, vector<8x256xf32>
    %38 = arith.truncf %26 : vector<8x512xf32> to vector<8x512xbf16>
    %cst_7 = arith.constant dense<0.000000e+00> : vector<8x256xf32>
    %39 = tpu.matmul %38, %36, %cst_7 {dimension_numbers = #tpu.dot_dimension_numbers<[1], [0], [0], [1], [0, 0, 1, 1], [], []>} : vector<8x512xbf16>, vector<512x256xbf16>, vector<8x256xf32> -> vector<8x256xf32>
    %40 = arith.addf %37, %39 : vector<8x256xf32>
    %c0_8 = arith.constant 0 : index
    %c0_9 = arith.constant 0 : index
    %41 = vector.load %arg4[%c0_8, %c0_9] : memref<8x256xf32, #tpu.memory_space<vmem>>, vector<8x256xf32>
    tpu.vector_store %arg4[%c0_8, %c0_9], %40 {strides = array<i32>} : memref<8x256xf32, #tpu.memory_space<vmem>>, vector<8x256xf32>,
    return
  }
  func.func @transform_0(%arg0: i32, %arg1: i32) -> (i32, i32) {
    %c0_i32 = arith.constant 0 : i32
    %c0_i32_0 = arith.constant 0 : i32
    return %c0_i32, %arg1 : i32, i32
  }
  func.func @transform_1(%arg0: i32, %arg1: i32) -> (i32, i32) {
    %c0_i32 = arith.constant 0 : i32
    %c0_i32_0 = arith.constant 0 : i32
    return %arg1, %c0_i32 : i32, i32
  }
  func.func @transform_2(%arg0: i32, %arg1: i32) -> (i32, i32) {
    %c0_i32 = arith.constant 0 : i32
    %c0_i32_0 = arith.constant 0 : i32
    return %c0_i32, %arg0 : i32, i32
  }
}

</mosaic_0001>

<llo_original>
// kernel: tpu_custom_call.1
$region0: #{tpu_custom_call.1}
  #allocation0 [shape = 'u32[]', space=smem, size = 0x4, offset = 0x4, fixed_abs, tag = 'smem constant byte address 0x4 - core index']
  #allocation1 [shape = 'u32[144,128]{1,0:T(1,128)}', space=vmem, size = 0x12000, scoped, tag = 'internal scratch']
  %s0 = inlined_call_operand.vmem [shape: f32[3,512], index: 0, kind: input, shape index: {}]
  %s1 = inlined_call_operand.vmem [shape: s32[512,1], index: 1, kind: input, shape index: {}]
  %s2 = inlined_call_operand.hbm [shape: f32[8,256], index: 2, kind: output, shape index: {}]
  %s3 = sld [smem:[#allocation0]]
  $region22: #{tpu_custom_call.1} parent=0
    _
  %s5 = ssub.s32 1, %s3
  %s6 = scalar_select 0, %s5, %s3
  $region1: #{tpu_custom_call.1} parent=0
    #allocation2 [shape = 'u8[8192]{0}', space=vmem, size = 0x2000, scoped, tag = 'output window, operand 0, single buffered']
    #allocation3 [shape = 's32[1]{0}', space=sflag, size = 0x4, scoped, tag = 'scoped memory for tpu_custom_call.1']
    %7 = vsyncpa [#allocation3], 0
    // Predicated region
    $region2: #{tpu_custom_call.1} parent=1 // pred_check
      _
    $region3: #{tpu_custom_call.1} parent=1 // pred_check_branch
      %9 = sbr.rel (0) target = $region5
    $region4: #{tpu_custom_call.1} parent=1 // pred_region
      _
    $region5: #{tpu_custom_call.1} parent=1 // pred_fallthru
      _
    // Predicated region
    $region6: #{tpu_custom_call.1} parent=1 // pred_check
      _
    $region7: #{tpu_custom_call.1} parent=1 // pred_check_branch
      %11 = sbr.rel (0) target = $region9
    $region8: #{tpu_custom_call.1} parent=1 // pred_region
      _
    $region9: #{tpu_custom_call.1} parent=1 // pred_fallthru
      _
    %p12 = scmp.eq.s32.totalorder 0, 0
    // Predicated region
    $region10: #{tpu_custom_call.1} parent=1 // pred_check
      %p13 = pneg %p12
    $region11: #{tpu_custom_call.1} parent=1 // pred_check_branch
      %15 = sbr.rel (%p13) target = $region13
    $region12: #{tpu_custom_call.1} parent=1 // pred_region
      %16 = vst [vmem:[#allocation2] sm:$0xff] 0.0
      %17 = vst [vmem:[#allocation2 + $0x8] sm:$0xff] 0.0
    $region13: #{tpu_custom_call.1} parent=1 // pred_fallthru
      _
    %v18 = vld [vmem:[%s0] sm:$0x77]
    %v19 = vld [vmem:[%s0 + $0x8] sm:$0x77]
    %v20 = vmul.f32 %v18, %v18
    %v21 = vmul.f32 %v19, %v19
    %v24 = vrot.slane %v20, 5
    %v25 = vrot.slane %v24, 4
    %v26 = vrot.slane %v21, 5
    %v27 = vrot.slane %v26, 4
    %v30 = vadd.f32 %v20, %v25
    %v31 = vadd.f32 %v21, %v27
    %v32 = vrot.slane %v20, 6
    %v33 = vrot.slane %v32, 4
    %v34 = vrot.slane %v21, 6
    %v35 = vrot.slane %v34, 4
    %v38 = vadd.f32 %v30, %v33
    %v39 = vadd.f32 %v31, %v35
    %v40 = vrsqrt.pop %v38
    %v41 = vmul.f32 %v38, %v40
    %vm42 = vcmp.eq.f32.partialorder %v38, inf
    %v43 = vsel %vm42, %v38, %v41
    %vm44 = vcmp.eq.f32.partialorder %v38, 0.0
    %v45 = vand.u32 %v38, 2147483648
    %v46 = vsel %vm44, %v45, %v43
    %v47 = vrsqrt.pop %v39
    %v48 = vmul.f32 %v39, %v47
    %vm49 = vcmp.eq.f32.partialorder %v39, inf
    %v50 = vsel %vm49, %v39, %v48
    %vm51 = vcmp.eq.f32.partialorder %v39, 0.0
    %v52 = vand.u32 %v39, 2147483648
    %v53 = vsel %vm51, %v52, %v50
    %v54 = vmul.f32 %v46, 0.33333334
    %v55 = vmul.f32 %v53, 0.33333334
    %v56 = vmul.f32 %v54, %v54
    %v57 = vmul.f32 %v55, %v55
    %v58 = vmul.f32 %v56, %v54
    %v59 = vmul.f32 %v57, %v55
    %v60 = vmul.f32 %v58, %v54
    %v61 = vmul.f32 %v59, %v55
    %v62 = vmul.f32 %v60, %v54
    %v63 = vmul.f32 %v61, %v55
    %v64 = vmul.f32 %v62, %v54
    %v65 = vmul.f32 %v63, %v55
    %v66 = vmul.f32 %v64, %v54
    %v67 = vmul.f32 %v65, %v55
    %v70 = vlaneseq
    %v71 = vshrl.u32 %v70, 7
    %v72 = vsub.s32 0, %v71
    %v73 = vrot.slane %v54, %v72
    %v74 = vlaneseq
    %v75 = vshrl.u32 %v74, 7
    %v76 = vsub.s32 4, %v75
    %v77 = vrot.slane %v54, %v76
    %v78 = vlaneseq
    %v79 = vshrl.u32 %v78, 7
    %v80 = vsub.s32 0, %v79
    %v81 = vrot.slane %v55, %v80
    %v82 = vlaneseq
    %v83 = vshrl.u32 %v82, 7
    %v84 = vsub.s32 4, %v83
    %v85 = vrot.slane %v55, %v84
    %v92 = vlaneseq
    %v93 = vshrl.u32 %v92, 7
    %v94 = vsub.s32 0, %v93
    %v95 = vrot.slane %v56, %v94
    %v96 = vlaneseq
    %v97 = vshrl.u32 %v96, 7
    %v98 = vsub.s32 4, %v97
    %v99 = vrot.slane %v56, %v98
    %v100 = vlaneseq
    %v101 = vshrl.u32 %v100, 7
    %v102 = vsub.s32 0, %v101
    %v103 = vrot.slane %v57, %v102
    %v104 = vlaneseq
    %v105 = vshrl.u32 %v104, 7
    %v106 = vsub.s32 4, %v105
    %v107 = vrot.slane %v57, %v106
    %v114 = vlaneseq
    %v115 = vshrl.u32 %v114, 7
    %v116 = vsub.s32 0, %v115
    %v117 = vrot.slane %v58, %v116
    %v118 = vlaneseq
    %v119 = vshrl.u32 %v118, 7
    %v120 = vsub.s32 4, %v119
    %v121 = vrot.slane %v58, %v120
    %v122 = vlaneseq
    %v123 = vshrl.u32 %v122, 7
    %v124 = vsub.s32 0, %v123
    %v125 = vrot.slane %v59, %v124
    %v126 = vlaneseq
    %v127 = vshrl.u32 %v126, 7
    %v128 = vsub.s32 4, %v127
    %v129 = vrot.slane %v59, %v128
    %v136 = vlaneseq
    %v137 = vshrl.u32 %v136, 7
    %v138 = vsub.s32 0, %v137
    %v139 = vrot.slane %v60, %v138
    %v140 = vlaneseq
    %v141 = vshrl.u32 %v140, 7
    %v142 = vsub.s32 4, %v141
    %v143 = vrot.slane %v60, %v142
    %v144 = vlaneseq
    %v145 = vshrl.u32 %v144, 7
    %v146 = vsub.s32 0, %v145
    %v147 = vrot.slane %v61, %v146
    %v148 = vlaneseq
    %v149 = vshrl.u32 %v148, 7
    %v150 = vsub.s32 4, %v149
    %v151 = vrot.slane %v61, %v150
    %v158 = vlaneseq
    %v159 = vshrl.u32 %v158, 7
    %v160 = vsub.s32 0, %v159
    %v161 = vrot.slane %v62, %v160
    %v162 = vlaneseq
    %v163 = vshrl.u32 %v162, 7
    %v164 = vsub.s32 4, %v163
    %v165 = vrot.slane %v62, %v164
    %v166 = vlaneseq
    %v167 = vshrl.u32 %v166, 7
    %v168 = vsub.s32 0, %v167
    %v169 = vrot.slane %v63, %v168
    %v170 = vlaneseq
    %v171 = vshrl.u32 %v170, 7
    %v172 = vsub.s32 4, %v171
    %v173 = vrot.slane %v63, %v172
    %v180 = vlaneseq
    %v181 = vshrl.u32 %v180, 7
    %v182 = vsub.s32 0, %v181
    %v183 = vrot.slane %v64, %v182
    %v184 = vlaneseq
    %v185 = vshrl.u32 %v184, 7
    %v186 = vsub.s32 4, %v185
    %v187 = vrot.slane %v64, %v186
    %v188 = vlaneseq
    %v189 = vshrl.u32 %v188, 7
    %v190 = vsub.s32 0, %v189
    %v191 = vrot.slane %v65, %v190
    %v192 = vlaneseq
    %v193 = vshrl.u32 %v192, 7
    %v194 = vsub.s32 4, %v193
    %v195 = vrot.slane %v65, %v194
    %v202 = vlaneseq
    %v203 = vshrl.u32 %v202, 7
    %v204 = vsub.s32 0, %v203
    %v205 = vrot.slane %v66, %v204
    %v206 = vlaneseq
    %v207 = vshrl.u32 %v206, 7
    %v208 = vsub.s32 4, %v207
    %v209 = vrot.slane %v66, %v208
    %v210 = vlaneseq
    %v211 = vshrl.u32 %v210, 7
    %v212 = vsub.s32 0, %v211
    %v213 = vrot.slane %v67, %v212
    %v214 = vlaneseq
    %v215 = vshrl.u32 %v214, 7
    %v216 = vsub.s32 4, %v215
    %v217 = vrot.slane %v67, %v216
    %vm222 = vcmask 1040384
    %v223 = vsel %vm222, 1.0, %v73
    %v224 = vsel %vm222, 1.0, %v77
    %v225 = vsel %vm222, 1.0, %v81
    %v226 = vsel %vm222, 1.0, %v85
    %vm227 = vcmask 1041408
    %v228 = vsel %vm227, %v223, %v95
    %v229 = vsel %vm227, %v224, %v99
    %v230 = vsel %vm227, %v225, %v103
    %v231 = vsel %vm227, %v226, %v107
    %vm232 = vcmask 1042432
    %v233 = vsel %vm232, %v228, %v117
    %v234 = vsel %vm232, %v229, %v121
    %v235 = vsel %vm232, %v230, %v125
    %v236 = vsel %vm232, %v231, %v129
    %vm237 = vcmask 1043456
    %v238 = vsel %vm237, %v233, %v139
    %v239 = vsel %vm237, %v234, %v143
    %v240 = vsel %vm237, %v235, %v147
    %v241 = vsel %vm237, %v236, %v151
    %vm242 = vcmask 1044480
    %v243 = vsel %vm242, %v238, %v161
    %v244 = vsel %vm242, %v239, %v165
    %v245 = vsel %vm242, %v240, %v169
    %v246 = vsel %vm242, %v241, %v173
    %vm247 = vcmask 1045504
    %v248 = vsel %vm247, %v243, %v183
    %v249 = vsel %vm247, %v244, %v187
    %v250 = vsel %vm247, %v245, %v191
    %v251 = vsel %vm247, %v246, %v195
    %vm252 = vcmask 1046528
    %v253 = vsel %vm252, %v248, %v205
    %v254 = vsel %vm252, %v249, %v209
    %v255 = vsel %vm252, %v250, %v213
    %v256 = vsel %vm252, %v251, %v217
    %v257 = vlaneseq
    %v258 = vand.u32 %v257, 127
    %v259 = vadd.s32 %v258, 128
    %s260 = smul.u32 0, 256
    %v261 = vstv %s260
    %v262 = vadd.s32 %v258, %v261
    %v263 = vadd.s32 %v259, %v261
    %v264 = vld [vmem:[%s1] sm:$0xff]
    %v265 = vld [vmem:[%s1 + $0x8] sm:$0xff]
    %v266 = vld [vmem:[%s1 + $0x10] sm:$0xff]
    %v267 = vld [vmem:[%s1 + $0x18] sm:$0xff]
    %v268 = vld [vmem:[%s1 + $0x20] sm:$0xff]
    %v269 = vld [vmem:[%s1 + $0x28] sm:$0xff]
    %v270 = vld [vmem:[%s1 + $0x30] sm:$0xff]
    %v271 = vld [vmem:[%s1 + $0x38] sm:$0xff]
    %v272 = vld [vmem:[%s1 + $0x40] sm:$0xff]
    %v273 = vld [vmem:[%s1 + $0x48] sm:$0xff]
    %v274 = vld [vmem:[%s1 + $0x50] sm:$0xff]
    %v275 = vld [vmem:[%s1 + $0x58] sm:$0xff]
    %v276 = vld [vmem:[%s1 + $0x60] sm:$0xff]
    %v277 = vld [vmem:[%s1 + $0x68] sm:$0xff]
    %v278 = vld [vmem:[%s1 + $0x70] sm:$0xff]
    %v279 = vld [vmem:[%s1 + $0x78] sm:$0xff]
    %v280 = vld [vmem:[%s1 + $0x80] sm:$0xff]
    %v281 = vld [vmem:[%s1 + $0x88] sm:$0xff]
    %v282 = vld [vmem:[%s1 + $0x90] sm:$0xff]
    %v283 = vld [vmem:[%s1 + $0x98] sm:$0xff]
    %v284 = vld [vmem:[%s1 + $0xa0] sm:$0xff]
    %v285 = vld [vmem:[%s1 + $0xa8] sm:$0xff]
    %v286 = vld [vmem:[%s1 + $0xb0] sm:$0xff]
    %v287 = vld [vmem:[%s1 + $0xb8] sm:$0xff]
    %v288 = vld [vmem:[%s1 + $0xc0] sm:$0xff]
    %v289 = vld [vmem:[%s1 + $0xc8] sm:$0xff]
    %v290 = vld [vmem:[%s1 + $0xd0] sm:$0xff]
    %v291 = vld [vmem:[%s1 + $0xd8] sm:$0xff]
    %v292 = vld [vmem:[%s1 + $0xe0] sm:$0xff]
    %v293 = vld [vmem:[%s1 + $0xe8] sm:$0xff]
    %v294 = vld [vmem:[%s1 + $0xf0] sm:$0xff]
    %v295 = vld [vmem:[%s1 + $0xf8] sm:$0xff]
    %v296 = vld [vmem:[%s1 + $0x100] sm:$0xff]
    %v297 = vld [vmem:[%s1 + $0x108] sm:$0xff]
    %v298 = vld [vmem:[%s1 + $0x110] sm:$0xff]
    %v299 = vld [vmem:[%s1 + $0x118] sm:$0xff]
    %v300 = vld [vmem:[%s1 + $0x120] sm:$0xff]
    %v301 = vld [vmem:[%s1 + $0x128] sm:$0xff]
    %v302 = vld [vmem:[%s1 + $0x130] sm:$0xff]
    %v303 = vld [vmem:[%s1 + $0x138] sm:$0xff]
    %v304 = vld [vmem:[%s1 + $0x140] sm:$0xff]
    %v305 = vld [vmem:[%s1 + $0x148] sm:$0xff]
    %v306 = vld [vmem:[%s1 + $0x150] sm:$0xff]
    %v307 = vld [vmem:[%s1 + $0x158] sm:$0xff]
    %v308 = vld [vmem:[%s1 + $0x160] sm:$0xff]
    %v309 = vld [vmem:[%s1 + $0x168] sm:$0xff]
    %v310 = vld [vmem:[%s1 + $0x170] sm:$0xff]
    %v311 = vld [vmem:[%s1 + $0x178] sm:$0xff]
    %v312 = vld [vmem:[%s1 + $0x180] sm:$0xff]
    %v313 = vld [vmem:[%s1 + $0x188] sm:$0xff]
    %v314 = vld [vmem:[%s1 + $0x190] sm:$0xff]
    %v315 = vld [vmem:[%s1 + $0x198] sm:$0xff]
    %v316 = vld [vmem:[%s1 + $0x1a0] sm:$0xff]
    %v317 = vld [vmem:[%s1 + $0x1a8] sm:$0xff]
    %v318 = vld [vmem:[%s1 + $0x1b0] sm:$0xff]
    %v319 = vld [vmem:[%s1 + $0x1b8] sm:$0xff]
    %v320 = vld [vmem:[%s1 + $0x1c0] sm:$0xff]
    %v321 = vld [vmem:[%s1 + $0x1c8] sm:$0xff]
    %v322 = vld [vmem:[%s1 + $0x1d0] sm:$0xff]
    %v323 = vld [vmem:[%s1 + $0x1d8] sm:$0xff]
    %v324 = vld [vmem:[%s1 + $0x1e0] sm:$0xff]
    %v325 = vld [vmem:[%s1 + $0x1e8] sm:$0xff]
    %v326 = vld [vmem:[%s1 + $0x1f0] sm:$0xff]
    %v327 = vld [vmem:[%s1 + $0x1f8] sm:$0xff]
    %328 = vset.pattern.permute.xlu0 0
    %329 = vperm.xlu0 %328, %v264
    %v330 = vpop.permute.xlu0 %329
    %331 = vset.pattern.permute.xlu0 0
    %332 = vperm.xlu0 %331, %v265
    %v333 = vpop.permute.xlu0 %332
    %334 = vset.pattern.permute.xlu0 0
    %335 = vperm.xlu0 %334, %v266
    %v336 = vpop.permute.xlu0 %335
    %337 = vset.pattern.permute.xlu0 0
    %338 = vperm.xlu0 %337, %v267
    %v339 = vpop.permute.xlu0 %338
    %340 = vset.pattern.permute.xlu0 0
    %341 = vperm.xlu0 %340, %v268
    %v342 = vpop.permute.xlu0 %341
    %343 = vset.pattern.permute.xlu0 0
    %344 = vperm.xlu0 %343, %v269
    %v345 = vpop.permute.xlu0 %344
    %346 = vset.pattern.permute.xlu0 0
    %347 = vperm.xlu0 %346, %v270
    %v348 = vpop.permute.xlu0 %347
    %349 = vset.pattern.permute.xlu0 0
    %350 = vperm.xlu0 %349, %v271
    %v351 = vpop.permute.xlu0 %350
    %352 = vset.pattern.permute.xlu0 0
    %353 = vperm.xlu0 %352, %v272
    %v354 = vpop.permute.xlu0 %353
    %355 = vset.pattern.permute.xlu0 0
    %356 = vperm.xlu0 %355, %v273
    %v357 = vpop.permute.xlu0 %356
    %358 = vset.pattern.permute.xlu0 0
    %359 = vperm.xlu0 %358, %v274
    %v360 = vpop.permute.xlu0 %359
    %361 = vset.pattern.permute.xlu0 0
    %362 = vperm.xlu0 %361, %v275
    %v363 = vpop.permute.xlu0 %362
    %364 = vset.pattern.permute.xlu0 0
    %365 = vperm.xlu0 %364, %v276
    %v366 = vpop.permute.xlu0 %365
    %367 = vset.pattern.permute.xlu0 0
    %368 = vperm.xlu0 %367, %v277
    %v369 = vpop.permute.xlu0 %368
    %370 = vset.pattern.permute.xlu0 0
    %371 = vperm.xlu0 %370, %v278
    %v372 = vpop.permute.xlu0 %371
    %373 = vset.pattern.permute.xlu0 0
    %374 = vperm.xlu0 %373, %v279
    %v375 = vpop.permute.xlu0 %374
    %376 = vset.pattern.permute.xlu0 0
    %377 = vperm.xlu0 %376, %v280
    %v378 = vpop.permute.xlu0 %377
    %379 = vset.pattern.permute.xlu0 0
    %380 = vperm.xlu0 %379, %v281
    %v381 = vpop.permute.xlu0 %380
    %382 = vset.pattern.permute.xlu0 0
    %383 = vperm.xlu0 %382, %v282
    %v384 = vpop.permute.xlu0 %383
    %385 = vset.pattern.permute.xlu0 0
    %386 = vperm.xlu0 %385, %v283
    %v387 = vpop.permute.xlu0 %386
    %388 = vset.pattern.permute.xlu0 0
    %389 = vperm.xlu0 %388, %v284
    %v390 = vpop.permute.xlu0 %389
    %391 = vset.pattern.permute.xlu0 0
    %392 = vperm.xlu0 %391, %v285
    %v393 = vpop.permute.xlu0 %392
    %394 = vset.pattern.permute.xlu0 0
    %395 = vperm.xlu0 %394, %v286
    %v396 = vpop.permute.xlu0 %395
    %397 = vset.pattern.permute.xlu0 0
    %398 = vperm.xlu0 %397, %v287
    %v399 = vpop.permute.xlu0 %398
    %400 = vset.pattern.permute.xlu0 0
    %401 = vperm.xlu0 %400, %v288
    %v402 = vpop.permute.xlu0 %401
    %403 = vset.pattern.permute.xlu0 0
    %404 = vperm.xlu0 %403, %v289
    %v405 = vpop.permute.xlu0 %404
    %406 = vset.pattern.permute.xlu0 0
    %407 = vperm.xlu0 %406, %v290
    %v408 = vpop.permute.xlu0 %407
    %409 = vset.pattern.permute.xlu0 0
    %410 = vperm.xlu0 %409, %v291
    %v411 = vpop.permute.xlu0 %410
    %412 = vset.pattern.permute.xlu0 0
    %413 = vperm.xlu0 %412, %v292
    %v414 = vpop.permute.xlu0 %413
    %415 = vset.pattern.permute.xlu0 0
    %416 = vperm.xlu0 %415, %v293
    %v417 = vpop.permute.xlu0 %416
    %418 = vset.pattern.permute.xlu0 0
    %419 = vperm.xlu0 %418, %v294
    %v420 = vpop.permute.xlu0 %419
    %421 = vset.pattern.permute.xlu0 0
    %422 = vperm.xlu0 %421, %v295
    %v423 = vpop.permute.xlu0 %422
    %424 = vset.pattern.permute.xlu0 0
    %425 = vperm.xlu0 %424, %v296
    %v426 = vpop.permute.xlu0 %425
    %427 = vset.pattern.permute.xlu0 0
    %428 = vperm.xlu0 %427, %v297
    %v429 = vpop.permute.xlu0 %428
    %430 = vset.pattern.permute.xlu0 0
    %431 = vperm.xlu0 %430, %v298
    %v432 = vpop.permute.xlu0 %431
    %433 = vset.pattern.permute.xlu0 0
    %434 = vperm.xlu0 %433, %v299
    %v435 = vpop.permute.xlu0 %434
    %436 = vset.pattern.permute.xlu0 0
    %437 = vperm.xlu0 %436, %v300
    %v438 = vpop.permute.xlu0 %437
    %439 = vset.pattern.permute.xlu0 0
    %440 = vperm.xlu0 %439, %v301
    %v441 = vpop.permute.xlu0 %440
    %442 = vset.pattern.permute.xlu0 0
    %443 = vperm.xlu0 %442, %v302
    %v444 = vpop.permute.xlu0 %443
    %445 = vset.pattern.permute.xlu0 0
    %446 = vperm.xlu0 %445, %v303
    %v447 = vpop.permute.xlu0 %446
    %448 = vset.pattern.permute.xlu0 0
    %449 = vperm.xlu0 %448, %v304
    %v450 = vpop.permute.xlu0 %449
    %451 = vset.pattern.permute.xlu0 0
    %452 = vperm.xlu0 %451, %v305
    %v453 = vpop.permute.xlu0 %452
    %454 = vset.pattern.permute.xlu0 0
    %455 = vperm.xlu0 %454, %v306
    %v456 = vpop.permute.xlu0 %455
    %457 = vset.pattern.permute.xlu0 0
    %458 = vperm.xlu0 %457, %v307
    %v459 = vpop.permute.xlu0 %458
    %460 = vset.pattern.permute.xlu0 0
    %461 = vperm.xlu0 %460, %v308
    %v462 = vpop.permute.xlu0 %461
    %463 = vset.pattern.permute.xlu0 0
    %464 = vperm.xlu0 %463, %v309
    %v465 = vpop.permute.xlu0 %464
    %466 = vset.pattern.permute.xlu0 0
    %467 = vperm.xlu0 %466, %v310
    %v468 = vpop.permute.xlu0 %467
    %469 = vset.pattern.permute.xlu0 0
    %470 = vperm.xlu0 %469, %v311
    %v471 = vpop.permute.xlu0 %470
    %472 = vset.pattern.permute.xlu0 0
    %473 = vperm.xlu0 %472, %v312
    %v474 = vpop.permute.xlu0 %473
    %475 = vset.pattern.permute.xlu0 0
    %476 = vperm.xlu0 %475, %v313
    %v477 = vpop.permute.xlu0 %476
    %478 = vset.pattern.permute.xlu0 0
    %479 = vperm.xlu0 %478, %v314
    %v480 = vpop.permute.xlu0 %479
    %481 = vset.pattern.permute.xlu0 0
    %482 = vperm.xlu0 %481, %v315
    %v483 = vpop.permute.xlu0 %482
    %484 = vset.pattern.permute.xlu0 0
    %485 = vperm.xlu0 %484, %v316
    %v486 = vpop.permute.xlu0 %485
    %487 = vset.pattern.permute.xlu0 0
    %488 = vperm.xlu0 %487, %v317
    %v489 = vpop.permute.xlu0 %488
    %490 = vset.pattern.permute.xlu0 0
    %491 = vperm.xlu0 %490, %v318
    %v492 = vpop.permute.xlu0 %491
    %493 = vset.pattern.permute.xlu0 0
    %494 = vperm.xlu0 %493, %v319
    %v495 = vpop.permute.xlu0 %494
    %496 = vset.pattern.permute.xlu0 0
    %497 = vperm.xlu0 %496, %v320
    %v498 = vpop.permute.xlu0 %497
    %499 = vset.pattern.permute.xlu0 0
    %500 = vperm.xlu0 %499, %v321
    %v501 = vpop.permute.xlu0 %500
    %502 = vset.pattern.permute.xlu0 0
    %503 = vperm.xlu0 %502, %v322
    %v504 = vpop.permute.xlu0 %503
    %505 = vset.pattern.permute.xlu0 0
    %506 = vperm.xlu0 %505, %v323
    %v507 = vpop.permute.xlu0 %506
    %508 = vset.pattern.permute.xlu0 0
    %509 = vperm.xlu0 %508, %v324
    %v510 = vpop.permute.xlu0 %509
    %511 = vset.pattern.permute.xlu0 0
    %512 = vperm.xlu0 %511, %v325
    %v513 = vpop.permute.xlu0 %512
    %514 = vset.pattern.permute.xlu0 0
    %515 = vperm.xlu0 %514, %v326
    %v516 = vpop.permute.xlu0 %515
    %517 = vset.pattern.permute.xlu0 0
    %518 = vperm.xlu0 %517, %v327
    %v519 = vpop.permute.xlu0 %518
    %vm520 = vcmp.eq.s32.totalorder %v330, %v262
    %vm521 = vcmp.eq.s32.totalorder %v330, %v263
    %vm522 = vcmp.eq.s32.totalorder %v333, %v262
    %vm523 = vcmp.eq.s32.totalorder %v333, %v263
    %vm524 = vcmp.eq.s32.totalorder %v336, %v262
    %vm525 = vcmp.eq.s32.totalorder %v336, %v263
    %vm526 = vcmp.eq.s32.totalorder %v339, %v262
    %vm527 = vcmp.eq.s32.totalorder %v339, %v263
    %vm528 = vcmp.eq.s32.totalorder %v342, %v262
    %vm529 = vcmp.eq.s32.totalorder %v342, %v263
    %vm530 = vcmp.eq.s32.totalorder %v345, %v262
    %vm531 = vcmp.eq.s32.totalorder %v345, %v263
    %vm532 = vcmp.eq.s32.totalorder %v348, %v262
    %vm533 = vcmp.eq.s32.totalorder %v348, %v263
    %vm534 = vcmp.eq.s32.totalorder %v351, %v262
    %vm535 = vcmp.eq.s32.totalorder %v351, %v263
    %vm536 = vcmp.eq.s32.totalorder %v354, %v262
    %vm537 = vcmp.eq.s32.totalorder %v354, %v263
    %vm538 = vcmp.eq.s32.totalorder %v357, %v262
    %vm539 = vcmp.eq.s32.totalorder %v357, %v263
    %vm540 = vcmp.eq.s32.totalorder %v360, %v262
    %vm541 = vcmp.eq.s32.totalorder %v360, %v263
    %vm542 = vcmp.eq.s32.totalorder %v363, %v262
    %vm543 = vcmp.eq.s32.totalorder %v363, %v263
    %vm544 = vcmp.eq.s32.totalorder %v366, %v262
    %vm545 = vcmp.eq.s32.totalorder %v366, %v263
    %vm546 = vcmp.eq.s32.totalorder %v369, %v262
    %vm547 = vcmp.eq.s32.totalorder %v369, %v263
    %vm548 = vcmp.eq.s32.totalorder %v372, %v262
    %vm549 = vcmp.eq.s32.totalorder %v372, %v263
    %vm550 = vcmp.eq.s32.totalorder %v375, %v262
    %vm551 = vcmp.eq.s32.totalorder %v375, %v263
    %vm552 = vcmp.eq.s32.totalorder %v378, %v262
    %vm553 = vcmp.eq.s32.totalorder %v378, %v263
    %vm554 = vcmp.eq.s32.totalorder %v381, %v262
    %vm555 = vcmp.eq.s32.totalorder %v381, %v263
    %vm556 = vcmp.eq.s32.totalorder %v384, %v262
    %vm557 = vcmp.eq.s32.totalorder %v384, %v263
    %vm558 = vcmp.eq.s32.totalorder %v387, %v262
    %vm559 = vcmp.eq.s32.totalorder %v387, %v263
    %vm560 = vcmp.eq.s32.totalorder %v390, %v262
    %vm561 = vcmp.eq.s32.totalorder %v390, %v263
    %vm562 = vcmp.eq.s32.totalorder %v393, %v262
    %vm563 = vcmp.eq.s32.totalorder %v393, %v263
    %vm564 = vcmp.eq.s32.totalorder %v396, %v262
    %vm565 = vcmp.eq.s32.totalorder %v396, %v263
    %vm566 = vcmp.eq.s32.totalorder %v399, %v262
    %vm567 = vcmp.eq.s32.totalorder %v399, %v263
    %vm568 = vcmp.eq.s32.totalorder %v402, %v262
    %vm569 = vcmp.eq.s32.totalorder %v402, %v263
    %vm570 = vcmp.eq.s32.totalorder %v405, %v262
    %vm571 = vcmp.eq.s32.totalorder %v405, %v263
    %vm572 = vcmp.eq.s32.totalorder %v408, %v262
    %vm573 = vcmp.eq.s32.totalorder %v408, %v263
    %vm574 = vcmp.eq.s32.totalorder %v411, %v262
    %vm575 = vcmp.eq.s32.totalorder %v411, %v263
    %vm576 = vcmp.eq.s32.totalorder %v414, %v262
    %vm577 = vcmp.eq.s32.totalorder %v414, %v263
    %vm578 = vcmp.eq.s32.totalorder %v417, %v262
    %vm579 = vcmp.eq.s32.totalorder %v417, %v263
    %vm580 = vcmp.eq.s32.totalorder %v420, %v262
    %vm581 = vcmp.eq.s32.totalorder %v420, %v263
    %vm582 = vcmp.eq.s32.totalorder %v423, %v262
    %vm583 = vcmp.eq.s32.totalorder %v423, %v263
    %vm584 = vcmp.eq.s32.totalorder %v426, %v262
    %vm585 = vcmp.eq.s32.totalorder %v426, %v263
    %vm586 = vcmp.eq.s32.totalorder %v429, %v262
    %vm587 = vcmp.eq.s32.totalorder %v429, %v263
    %vm588 = vcmp.eq.s32.totalorder %v432, %v262
    %vm589 = vcmp.eq.s32.totalorder %v432, %v263
    %vm590 = vcmp.eq.s32.totalorder %v435, %v262
    %vm591 = vcmp.eq.s32.totalorder %v435, %v263
    %vm592 = vcmp.eq.s32.totalorder %v438, %v262
    %vm593 = vcmp.eq.s32.totalorder %v438, %v263
    %vm594 = vcmp.eq.s32.totalorder %v441, %v262
    %vm595 = vcmp.eq.s32.totalorder %v441, %v263
    %vm596 = vcmp.eq.s32.totalorder %v444, %v262
    %vm597 = vcmp.eq.s32.totalorder %v444, %v263
    %vm598 = vcmp.eq.s32.totalorder %v447, %v262
    %vm599 = vcmp.eq.s32.totalorder %v447, %v263
    %vm600 = vcmp.eq.s32.totalorder %v450, %v262
    %vm601 = vcmp.eq.s32.totalorder %v450, %v263
    %vm602 = vcmp.eq.s32.totalorder %v453, %v262
    %vm603 = vcmp.eq.s32.totalorder %v453, %v263
    %vm604 = vcmp.eq.s32.totalorder %v456, %v262
    %vm605 = vcmp.eq.s32.totalorder %v456, %v263
    %vm606 = vcmp.eq.s32.totalorder %v459, %v262
    %vm607 = vcmp.eq.s32.totalorder %v459, %v263
    %vm608 = vcmp.eq.s32.totalorder %v462, %v262
    %vm609 = vcmp.eq.s32.totalorder %v462, %v263
    %vm610 = vcmp.eq.s32.totalorder %v465, %v262
    %vm611 = vcmp.eq.s32.totalorder %v465, %v263
    %vm612 = vcmp.eq.s32.totalorder %v468, %v262
    %vm613 = vcmp.eq.s32.totalorder %v468, %v263
    %vm614 = vcmp.eq.s32.totalorder %v471, %v262
    %vm615 = vcmp.eq.s32.totalorder %v471, %v263
    %vm616 = vcmp.eq.s32.totalorder %v474, %v262
    %vm617 = vcmp.eq.s32.totalorder %v474, %v263
    %vm618 = vcmp.eq.s32.totalorder %v477, %v262
    %vm619 = vcmp.eq.s32.totalorder %v477, %v263
    %vm620 = vcmp.eq.s32.totalorder %v480, %v262
    %vm621 = vcmp.eq.s32.totalorder %v480, %v263
    %vm622 = vcmp.eq.s32.totalorder %v483, %v262
    %vm623 = vcmp.eq.s32.totalorder %v483, %v263
    %vm624 = vcmp.eq.s32.totalorder %v486, %v262
    %vm625 = vcmp.eq.s32.totalorder %v486, %v263
    %vm626 = vcmp.eq.s32.totalorder %v489, %v262
    %vm627 = vcmp.eq.s32.totalorder %v489, %v263
    %vm628 = vcmp.eq.s32.totalorder %v492, %v262
    %vm629 = vcmp.eq.s32.totalorder %v492, %v263
    %vm630 = vcmp.eq.s32.totalorder %v495, %v262
    %vm631 = vcmp.eq.s32.totalorder %v495, %v263
    %vm632 = vcmp.eq.s32.totalorder %v498, %v262
    %vm633 = vcmp.eq.s32.totalorder %v498, %v263
    %vm634 = vcmp.eq.s32.totalorder %v501, %v262
    %vm635 = vcmp.eq.s32.totalorder %v501, %v263
    %vm636 = vcmp.eq.s32.totalorder %v504, %v262
    %vm637 = vcmp.eq.s32.totalorder %v504, %v263
    %vm638 = vcmp.eq.s32.totalorder %v507, %v262
    %vm639 = vcmp.eq.s32.totalorder %v507, %v263
    %vm640 = vcmp.eq.s32.totalorder %v510, %v262
    %vm641 = vcmp.eq.s32.totalorder %v510, %v263
    %vm642 = vcmp.eq.s32.totalorder %v513, %v262
    %vm643 = vcmp.eq.s32.totalorder %v513, %v263
    %vm644 = vcmp.eq.s32.totalorder %v516, %v262
    %vm645 = vcmp.eq.s32.totalorder %v516, %v263
    %vm646 = vcmp.eq.s32.totalorder %v519, %v262
    %vm647 = vcmp.eq.s32.totalorder %v519, %v263
    %v648 = vsel %vm520, 1, 0
    %v649 = vsel %vm521, 1, 0
    %v650 = vsel %vm522, 1, 0
    %v651 = vsel %vm523, 1, 0
    %v652 = vsel %vm524, 1, 0
    %v653 = vsel %vm525, 1, 0
    %v654 = vsel %vm526, 1, 0
    %v655 = vsel %vm527, 1, 0
    %v656 = vsel %vm528, 1, 0
    %v657 = vsel %vm529, 1, 0
    %v658 = vsel %vm530, 1, 0
    %v659 = vsel %vm531, 1, 0
    %v660 = vsel %vm532, 1, 0
    %v661 = vsel %vm533, 1, 0
    %v662 = vsel %vm534, 1, 0
    %v663 = vsel %vm535, 1, 0
    %v664 = vsel %vm536, 1, 0
    %v665 = vsel %vm537, 1, 0
    %v666 = vsel %vm538, 1, 0
    %v667 = vsel %vm539, 1, 0
    %v668 = vsel %vm540, 1, 0
    %v669 = vsel %vm541, 1, 0
    %v670 = vsel %vm542, 1, 0
    %v671 = vsel %vm543, 1, 0
    %v672 = vsel %vm544, 1, 0
    %v673 = vsel %vm545, 1, 0
    %v674 = vsel %vm546, 1, 0
    %v675 = vsel %vm547, 1, 0
    %v676 = vsel %vm548, 1, 0
    %v677 = vsel %vm549, 1, 0
    %v678 = vsel %vm550, 1, 0
    %v679 = vsel %vm551, 1, 0
    %v680 = vsel %vm552, 1, 0
    %v681 = vsel %vm553, 1, 0
    %v682 = vsel %vm554, 1, 0
    %v683 = vsel %vm555, 1, 0
    %v684 = vsel %vm556, 1, 0
    %v685 = vsel %vm557, 1, 0
    %v686 = vsel %vm558, 1, 0
    %v687 = vsel %vm559, 1, 0
    %v688 = vsel %vm560, 1, 0
    %v689 = vsel %vm561, 1, 0
    %v690 = vsel %vm562, 1, 0
    %v691 = vsel %vm563, 1, 0
    %v692 = vsel %vm564, 1, 0
    %v693 = vsel %vm565, 1, 0
    %v694 = vsel %vm566, 1, 0
    %v695 = vsel %vm567, 1, 0
    %v696 = vsel %vm568, 1, 0
    %v697 = vsel %vm569, 1, 0
    %v698 = vsel %vm570, 1, 0
    %v699 = vsel %vm571, 1, 0
    %v700 = vsel %vm572, 1, 0
    %v701 = vsel %vm573, 1, 0
    %v702 = vsel %vm574, 1, 0
    %v703 = vsel %vm575, 1, 0
    %v704 = vsel %vm576, 1, 0
    %v705 = vsel %vm577, 1, 0
    %v706 = vsel %vm578, 1, 0
    %v707 = vsel %vm579, 1, 0
    %v708 = vsel %vm580, 1, 0
    %v709 = vsel %vm581, 1, 0
    %v710 = vsel %vm582, 1, 0
    %v711 = vsel %vm583, 1, 0
    %v712 = vsel %vm584, 1, 0
    %v713 = vsel %vm585, 1, 0
    %v714 = vsel %vm586, 1, 0
    %v715 = vsel %vm587, 1, 0
    %v716 = vsel %vm588, 1, 0
    %v717 = vsel %vm589, 1, 0
    %v718 = vsel %vm590, 1, 0
    %v719 = vsel %vm591, 1, 0
    %v720 = vsel %vm592, 1, 0
    %v721 = vsel %vm593, 1, 0
    %v722 = vsel %vm594, 1, 0
    %v723 = vsel %vm595, 1, 0
    %v724 = vsel %vm596, 1, 0
    %v725 = vsel %vm597, 1, 0
    %v726 = vsel %vm598, 1, 0
    %v727 = vsel %vm599, 1, 0
    %v728 = vsel %vm600, 1, 0
    %v729 = vsel %vm601, 1, 0
    %v730 = vsel %vm602, 1, 0
    %v731 = vsel %vm603, 1, 0
    %v732 = vsel %vm604, 1, 0
    %v733 = vsel %vm605, 1, 0
    %v734 = vsel %vm606, 1, 0
    %v735 = vsel %vm607, 1, 0
    %v736 = vsel %vm608, 1, 0
    %v737 = vsel %vm609, 1, 0
    %v738 = vsel %vm610, 1, 0
    %v739 = vsel %vm611, 1, 0
    %v740 = vsel %vm612, 1, 0
    %v741 = vsel %vm613, 1, 0
    %v742 = vsel %vm614, 1, 0
    %v743 = vsel %vm615, 1, 0
    %v744 = vsel %vm616, 1, 0
    %v745 = vsel %vm617, 1, 0
    %v746 = vsel %vm618, 1, 0
    %v747 = vsel %vm619, 1, 0
    %v748 = vsel %vm620, 1, 0
    %v749 = vsel %vm621, 1, 0
    %v750 = vsel %vm622, 1, 0
    %v751 = vsel %vm623, 1, 0
    %v752 = vsel %vm624, 1, 0
    %v753 = vsel %vm625, 1, 0
    %v754 = vsel %vm626, 1, 0
    %v755 = vsel %vm627, 1, 0
    %v756 = vsel %vm628, 1, 0
    %v757 = vsel %vm629, 1, 0
    %v758 = vsel %vm630, 1, 0
    %v759 = vsel %vm631, 1, 0
    %v760 = vsel %vm632, 1, 0
    %v761 = vsel %vm633, 1, 0
    %v762 = vsel %vm634, 1, 0
    %v763 = vsel %vm635, 1, 0
    %v764 = vsel %vm636, 1, 0
    %v765 = vsel %vm637, 1, 0
    %v766 = vsel %vm638, 1, 0
    %v767 = vsel %vm639, 1, 0
    %v768 = vsel %vm640, 1, 0
    %v769 = vsel %vm641, 1, 0
    %v770 = vsel %vm642, 1, 0
    %v771 = vsel %vm643, 1, 0
    %v772 = vsel %vm644, 1, 0
    %v773 = vsel %vm645, 1, 0
    %v774 = vsel %vm646, 1, 0
    %v775 = vsel %vm647, 1, 0
    %v776 = vcvt.s32.f32 %v648
    %v777 = vcvt.s32.f32 %v649
    %v778 = vcvt.s32.f32 %v650
    %v779 = vcvt.s32.f32 %v651
    %v780 = vcvt.s32.f32 %v652
    %v781 = vcvt.s32.f32 %v653
    %v782 = vcvt.s32.f32 %v654
    %v783 = vcvt.s32.f32 %v655
    %v784 = vcvt.s32.f32 %v656
    %v785 = vcvt.s32.f32 %v657
    %v786 = vcvt.s32.f32 %v658
    %v787 = vcvt.s32.f32 %v659
    %v788 = vcvt.s32.f32 %v660
    %v789 = vcvt.s32.f32 %v661
    %v790 = vcvt.s32.f32 %v662
    %v791 = vcvt.s32.f32 %v663
    %v792 = vcvt.s32.f32 %v664
    %v793 = vcvt.s32.f32 %v665
    %v794 = vcvt.s32.f32 %v666
    %v795 = vcvt.s32.f32 %v667
    %v796 = vcvt.s32.f32 %v668
    %v797 = vcvt.s32.f32 %v669
    %v798 = vcvt.s32.f32 %v670
    %v799 = vcvt.s32.f32 %v671
    %v800 = vcvt.s32.f32 %v672
    %v801 = vcvt.s32.f32 %v673
    %v802 = vcvt.s32.f32 %v674
    %v803 = vcvt.s32.f32 %v675
    %v804 = vcvt.s32.f32 %v676
    %v805 = vcvt.s32.f32 %v677
    %v806 = vcvt.s32.f32 %v678
    %v807 = vcvt.s32.f32 %v679
    %v808 = vcvt.s32.f32 %v680
    %v809 = vcvt.s32.f32 %v681
    %v810 = vcvt.s32.f32 %v682
    %v811 = vcvt.s32.f32 %v683
    %v812 = vcvt.s32.f32 %v684
    %v813 = vcvt.s32.f32 %v685
    %v814 = vcvt.s32.f32 %v686
    %v815 = vcvt.s32.f32 %v687
    %v816 = vcvt.s32.f32 %v688
    %v817 = vcvt.s32.f32 %v689
    %v818 = vcvt.s32.f32 %v690
    %v819 = vcvt.s32.f32 %v691
    %v820 = vcvt.s32.f32 %v692
    %v821 = vcvt.s32.f32 %v693
    %v822 = vcvt.s32.f32 %v694
    %v823 = vcvt.s32.f32 %v695
    %v824 = vcvt.s32.f32 %v696
    %v825 = vcvt.s32.f32 %v697
    %v826 = vcvt.s32.f32 %v698
    %v827 = vcvt.s32.f32 %v699
    %v828 = vcvt.s32.f32 %v700
    %v829 = vcvt.s32.f32 %v701
    %v830 = vcvt.s32.f32 %v702
    %v831 = vcvt.s32.f32 %v703
    %v832 = vcvt.s32.f32 %v704
    %v833 = vcvt.s32.f32 %v705
    %v834 = vcvt.s32.f32 %v706
    %v835 = vcvt.s32.f32 %v707
    %v836 = vcvt.s32.f32 %v708
    %v837 = vcvt.s32.f32 %v709
    %v838 = vcvt.s32.f32 %v710
    %v839 = vcvt.s32.f32 %v711
    %v840 = vcvt.s32.f32 %v712
    %v841 = vcvt.s32.f32 %v713
    %v842 = vcvt.s32.f32 %v714
    %v843 = vcvt.s32.f32 %v715
    %v844 = vcvt.s32.f32 %v716
    %v845 = vcvt.s32.f32 %v717
    %v846 = vcvt.s32.f32 %v718
    %v847 = vcvt.s32.f32 %v719
    %v848 = vcvt.s32.f32 %v720
    %v849 = vcvt.s32.f32 %v721
    %v850 = vcvt.s32.f32 %v722
    %v851 = vcvt.s32.f32 %v723
    %v852 = vcvt.s32.f32 %v724
    %v853 = vcvt.s32.f32 %v725
    %v854 = vcvt.s32.f32 %v726
    %v855 = vcvt.s32.f32 %v727
    %v856 = vcvt.s32.f32 %v728
    %v857 = vcvt.s32.f32 %v729
    %v858 = vcvt.s32.f32 %v730
    %v859 = vcvt.s32.f32 %v731
    %v860 = vcvt.s32.f32 %v732
    %v861 = vcvt.s32.f32 %v733
    %v862 = vcvt.s32.f32 %v734
    %v863 = vcvt.s32.f32 %v735
    %v864 = vcvt.s32.f32 %v736
    %v865 = vcvt.s32.f32 %v737
    %v866 = vcvt.s32.f32 %v738
    %v867 = vcvt.s32.f32 %v739
    %v868 = vcvt.s32.f32 %v740
    %v869 = vcvt.s32.f32 %v741
    %v870 = vcvt.s32.f32 %v742
    %v871 = vcvt.s32.f32 %v743
    %v872 = vcvt.s32.f32 %v744
    %v873 = vcvt.s32.f32 %v745
    %v874 = vcvt.s32.f32 %v746
    %v875 = vcvt.s32.f32 %v747
    %v876 = vcvt.s32.f32 %v748
    %v877 = vcvt.s32.f32 %v749
    %v878 = vcvt.s32.f32 %v750
    %v879 = vcvt.s32.f32 %v751
    %v880 = vcvt.s32.f32 %v752
    %v881 = vcvt.s32.f32 %v753
    %v882 = vcvt.s32.f32 %v754
    %v883 = vcvt.s32.f32 %v755
    %v884 = vcvt.s32.f32 %v756
    %v885 = vcvt.s32.f32 %v757
    %v886 = vcvt.s32.f32 %v758
    %v887 = vcvt.s32.f32 %v759
    %v888 = vcvt.s32.f32 %v760
    %v889 = vcvt.s32.f32 %v761
    %v890 = vcvt.s32.f32 %v762
    %v891 = vcvt.s32.f32 %v763
    %v892 = vcvt.s32.f32 %v764
    %v893 = vcvt.s32.f32 %v765
    %v894 = vcvt.s32.f32 %v766
    %v895 = vcvt.s32.f32 %v767
    %v896 = vcvt.s32.f32 %v768
    %v897 = vcvt.s32.f32 %v769
    %v898 = vcvt.s32.f32 %v770
    %v899 = vcvt.s32.f32 %v771
    %v900 = vcvt.s32.f32 %v772
    %v901 = vcvt.s32.f32 %v773
    %v902 = vcvt.s32.f32 %v774
    %v903 = vcvt.s32.f32 %v775
    %v904 = vpack.c.bf16 %v778, %v776
    %v905 = vpack.c.bf16 %v779, %v777
    %v906 = vpack.c.bf16 %v782, %v780
    %v907 = vpack.c.bf16 %v783, %v781
    %v908 = vpack.c.bf16 %v786, %v784
    %v909 = vpack.c.bf16 %v787, %v785
    %v910 = vpack.c.bf16 %v790, %v788
    %v911 = vpack.c.bf16 %v791, %v789
    %v912 = vpack.c.bf16 %v794, %v792
    %v913 = vpack.c.bf16 %v795, %v793
    %v914 = vpack.c.bf16 %v798, %v796
    %v915 = vpack.c.bf16 %v799, %v797
    %v916 = vpack.c.bf16 %v802, %v800
    %v917 = vpack.c.bf16 %v803, %v801
    %v918 = vpack.c.bf16 %v806, %v804
    %v919 = vpack.c.bf16 %v807, %v805
    %v920 = vpack.c.bf16 %v810, %v808
    %v921 = vpack.c.bf16 %v811, %v809
    %v922 = vpack.c.bf16 %v814, %v812
    %v923 = vpack.c.bf16 %v815, %v813
    %v924 = vpack.c.bf16 %v818, %v816
    %v925 = vpack.c.bf16 %v819, %v817
    %v926 = vpack.c.bf16 %v822, %v820
    %v927 = vpack.c.bf16 %v823, %v821
    %v928 = vpack.c.bf16 %v826, %v824
    %v929 = vpack.c.bf16 %v827, %v825
    %v930 = vpack.c.bf16 %v830, %v828
    %v931 = vpack.c.bf16 %v831, %v829
    %v932 = vpack.c.bf16 %v834, %v832
    %v933 = vpack.c.bf16 %v835, %v833
    %v934 = vpack.c.bf16 %v838, %v836
    %v935 = vpack.c.bf16 %v839, %v837
    %v936 = vpack.c.bf16 %v842, %v840
    %v937 = vpack.c.bf16 %v843, %v841
    %v938 = vpack.c.bf16 %v846, %v844
    %v939 = vpack.c.bf16 %v847, %v845
    %v940 = vpack.c.bf16 %v850, %v848
    %v941 = vpack.c.bf16 %v851, %v849
    %v942 = vpack.c.bf16 %v854, %v852
    %v943 = vpack.c.bf16 %v855, %v853
    %v944 = vpack.c.bf16 %v858, %v856
    %v945 = vpack.c.bf16 %v859, %v857
    %v946 = vpack.c.bf16 %v862, %v860
    %v947 = vpack.c.bf16 %v863, %v861
    %v948 = vpack.c.bf16 %v866, %v864
    %v949 = vpack.c.bf16 %v867, %v865
    %v950 = vpack.c.bf16 %v870, %v868
    %v951 = vpack.c.bf16 %v871, %v869
    %v952 = vpack.c.bf16 %v874, %v872
    %v953 = vpack.c.bf16 %v875, %v873
    %v954 = vpack.c.bf16 %v878, %v876
    %v955 = vpack.c.bf16 %v879, %v877
    %v956 = vpack.c.bf16 %v882, %v880
    %v957 = vpack.c.bf16 %v883, %v881
    %v958 = vpack.c.bf16 %v886, %v884
    %v959 = vpack.c.bf16 %v887, %v885
    %v960 = vpack.c.bf16 %v890, %v888
    %v961 = vpack.c.bf16 %v891, %v889
    %v962 = vpack.c.bf16 %v894, %v892
    %v963 = vpack.c.bf16 %v895, %v893
    %v964 = vpack.c.bf16 %v898, %v896
    %v965 = vpack.c.bf16 %v899, %v897
    %v966 = vpack.c.bf16 %v902, %v900
    %v967 = vpack.c.bf16 %v903, %v901
    %v968 = vld [vmem:[#allocation2] sm:$0xff]
    %v969 = vld [vmem:[#allocation2 + $0x8] sm:$0xff]
    %v970 = vpack.c.bf16 %v253, %v253
    %v971 = vpack.c.bf16 %v254, %v254
    %v972 = vpack.c.bf16 %v255, %v255
    %v973 = vpack.c.bf16 %v256, %v256
    %974 = vmatprep.subr.bf16.mxu0 %v905
    %975 = vmatpush1.bf16.msra.mxu0 %v904
    %976 = vmatprep.subr.bf16.mxu0 %v907
    %977 = vmatpush1.bf16.msra.mxu0 %v906
    %978 = vmatprep.subr.bf16.mxu0 %v909
    %979 = vmatpush1.bf16.msra.mxu0 %v908
    %980 = vmatprep.subr.bf16.mxu0 %v911
    %981 = vmatpush1.bf16.msra.mxu0 %v910
    %982 = vmatprep.subr.bf16.mxu0 %v913
    %983 = vmatpush1.bf16.msra.mxu0 %v912
    %984 = vmatprep.subr.bf16.mxu0 %v915
    %985 = vmatpush1.bf16.msra.mxu0 %v914
    %986 = vmatprep.subr.bf16.mxu0 %v917
    %987 = vmatpush1.bf16.msra.mxu0 %v916
    %988 = vmatprep.subr.bf16.mxu0 %v919
    %989 = vmatpush1.bf16.msra.mxu0 %v918
    %990 = vmatprep.subr.bf16.mxu0 %v921
    %991 = vmatpush1.bf16.msra.mxu0 %v920
    %992 = vmatprep.subr.bf16.mxu0 %v923
    %993 = vmatpush1.bf16.msra.mxu0 %v922
    %994 = vmatprep.subr.bf16.mxu0 %v925
    %995 = vmatpush1.bf16.msra.mxu0 %v924
    %996 = vmatprep.subr.bf16.mxu0 %v927
    %997 = vmatpush1.bf16.msra.mxu0 %v926
    %998 = vmatprep.subr.bf16.mxu0 %v929
    %999 = vmatpush1.bf16.msra.mxu0 %v928
    %1000 = vmatprep.subr.bf16.mxu0 %v931
    %1001 = vmatpush1.bf16.msra.mxu0 %v930
    %1002 = vmatprep.subr.bf16.mxu0 %v933
    %1003 = vmatpush1.bf16.msra.mxu0 %v932
    %1004 = vmatprep.subr.bf16.mxu0 %v935
    %1005 = vmatpush1.bf16.msra.mxu0 %v934
    %1006 = vmatprep.mubr.bf16.mxu0 %v971
    %1007 = vmatmul.mubr.bf16.gmra.mrb[0].mxu0 %v970
    %v1008 = vpop.f32.mrb[0].mxu0
    %v1009 = vadd.f32 0.0, %v1008
    %v1010 = vpop.f32.mrb[0].mxu0
    %v1011 = vadd.f32 0.0, %v1010
    %v1012 = vpop.f32.mrb[0].mxu0
    %v1013 = vpop.f32.mrb[0].mxu0
    %1014 = vdwg.mxu0
    %1015 = vmatprep.subr.bf16.mxu0 %v937
    %1016 = vmatpush1.bf16.msra.mxu0 %v936
    %1017 = vmatprep.subr.bf16.mxu0 %v939
    %1018 = vmatpush1.bf16.msra.mxu0 %v938
    %1019 = vmatprep.subr.bf16.mxu0 %v941
    %1020 = vmatpush1.bf16.msra.mxu0 %v940
    %1021 = vmatprep.subr.bf16.mxu0 %v943
    %1022 = vmatpush1.bf16.msra.mxu0 %v942
    %1023 = vmatprep.subr.bf16.mxu0 %v945
    %1024 = vmatpush1.bf16.msra.mxu0 %v944
    %1025 = vmatprep.subr.bf16.mxu0 %v947
    %1026 = vmatpush1.bf16.msra.mxu0 %v946
    %1027 = vmatprep.subr.bf16.mxu0 %v949
    %1028 = vmatpush1.bf16.msra.mxu0 %v948
    %1029 = vmatprep.subr.bf16.mxu0 %v951
    %1030 = vmatpush1.bf16.msra.mxu0 %v950
    %1031 = vmatprep.subr.bf16.mxu0 %v953
    %1032 = vmatpush1.bf16.msra.mxu0 %v952
    %1033 = vmatprep.subr.bf16.mxu0 %v955
    %1034 = vmatpush1.bf16.msra.mxu0 %v954
    %1035 = vmatprep.subr.bf16.mxu0 %v957
    %1036 = vmatpush1.bf16.msra.mxu0 %v956
    %1037 = vmatprep.subr.bf16.mxu0 %v959
    %1038 = vmatpush1.bf16.msra.mxu0 %v958
    %1039 = vmatprep.subr.bf16.mxu0 %v961
    %1040 = vmatpush1.bf16.msra.mxu0 %v960
    %1041 = vmatprep.subr.bf16.mxu0 %v963
    %1042 = vmatpush1.bf16.msra.mxu0 %v962
    %1043 = vmatprep.subr.bf16.mxu0 %v965
    %1044 = vmatpush1.bf16.msra.mxu0 %v964
    %1045 = vmatprep.subr.bf16.mxu0 %v967
    %1046 = vmatpush1.bf16.msra.mxu0 %v966
    %1047 = vmatprep.mubr.bf16.mxu0 %v973
    %1048 = vmatmul.mubr.bf16.gmra.mrb[0].mxu0 %v972
    %v1049 = vpop.f32.mrb[0].mxu0
    %v1050 = vadd.f32 %v1009, %v1049
    %v1051 = vpop.f32.mrb[0].mxu0
    %v1052 = vadd.f32 %v1011, %v1051
    %v1053 = vpop.f32.mrb[0].mxu0
    %v1054 = vpop.f32.mrb[0].mxu0
    %1055 = vdwg.mxu0
    %v1056 = vadd.f32 %v968, %v1050
    %v1057 = vadd.f32 %v969, %v1052
    %1058 = vst [vmem:[#allocation2] sm:$0xff] %v1056
    %1059 = vst [vmem:[#allocation2 + $0x8] sm:$0xff] %v1057
    // Predicated region
    $region14: #{tpu_custom_call.1} parent=1 // pred_check
      _
    $region15: #{tpu_custom_call.1} parent=1 // pred_check_branch
      %1061 = sbr.rel (0) target = $region17
    $region16: #{tpu_custom_call.1} parent=1 // pred_region
      %s1063 = ssub.s32 256, 256
      %1064 = vsyncadd [#allocation3], %s1063
      %s1066 = sshll.u32 [#allocation2], 4
      %s1067 = int_to_ptr.vmem [resolvable:$true] %s1066
      %1069 = dma.vmem_to_hbm [thread:$0]  %s1067, 256, %s2, [#allocation3]
    $region17: #{tpu_custom_call.1} parent=1 // pred_fallthru
      _
    // Predicated region
    $region18: #{tpu_custom_call.1} parent=1 // pred_check
      _
    $region19: #{tpu_custom_call.1} parent=1 // pred_check_branch
      %1071 = sbr.rel (0) target = $region21
    $region20: #{tpu_custom_call.1} parent=1 // pred_region
      %1072 = dma.done [#allocation3], 256
    $region21: #{tpu_custom_call.1} parent=1 // pred_fallthru
      _
    %1073 = vsyncpa [#allocation3], 1

</llo_original>
